<compile_context>
chip_gen: v5e
topology: v5e:2x2
jax: 0.10.0
libtpu: 0.0.40
codegen_flags: <defaults>
</compile_context>

<pallas_src>
import jax
import jax.numpy as jnp
from jax.experimental import pallas as pl
from jax.experimental.pallas import tpu as pltpu

HIDDEN = 16


def _mlp_kernel(x_ref, w1_ref, b1_ref, w2_ref, b2_ref, o_ref):
    # x_ref:  (TB, D)    f32  batch tile (pipelined over the grid)
    # w1_ref: (D, 16)    f32  resident (constant index_map)
    # b1_ref: (1, 16)    f32  resident
    # w2_ref: (1, 16)    f32  resident (PyTorch linear2.weight layout: (out, in))
    # b2_ref: (1, 1)     f32  scalar, SMEM
    # o_ref:  (1, 1, TB) f32  lane-dense output tile (batch on lanes)
    x = x_ref[...]                                                     # (TB, D)
    h = jnp.dot(x, w1_ref[...], preferred_element_type=jnp.float32)   # (TB, 16)  MXU
    h = jnp.tanh(h + b1_ref[...])                                      # VPU + EUP
    # Second layer: contract the 16-wide hidden dim; result comes out (1, TB)
    # with the batch on lanes -> unmasked lane-dense store.
    y = jnp.einsum("oh,bh->ob", w2_ref[...], h,
                   preferred_element_type=jnp.float32)                 # (1, TB)
    y = y + b2_ref[0, 0]                                               # scalar bias (SMEM)
    o_ref[...] = y.reshape(o_ref.shape)


def premier_modele_forward(x, w1, b1, w2, b2, *, tile_b=1024):
    """Fused forward: tanh(x @ w1 + b1) @ w2.T + b2.

    x:  (B, D) f32
    w1: (D, 16) f32  (pre-transposed PyTorch linear1.weight)
    b1: (1, 16) f32
    w2: (1, 16) f32  (PyTorch linear2.weight as-is: (out=1, in=16))
    b2: (1, 1)  f32
    returns: (B, 1) f32
    """
    B, D = x.shape
    H = w1.shape[1]

    # Batch tile: multiple of 256 (8/128-aligned), capped at `tile_b`, and no
    # larger than needed for small B.
    tb = max(256, min(tile_b, pl.cdiv(B, 256) * 256))
    num_tiles = pl.cdiv(B, tb)
    b_pad = num_tiles * tb
    if b_pad != B:
        x = jnp.pad(x, ((0, b_pad - B), (0, 0)))

    out = pl.pallas_call(
        _mlp_kernel,
        out_shape=jax.ShapeDtypeStruct((num_tiles, 1, tb), jnp.float32),
        grid_spec=pltpu.PrefetchScalarGridSpec(
            num_scalar_prefetch=0,
            grid=(num_tiles,),
            in_specs=[
                pl.BlockSpec((tb, D), lambda i: (i, 0)),   # x: tiled over batch
                pl.BlockSpec((D, H), lambda i: (0, 0)),    # w1: resident
                pl.BlockSpec((1, H), lambda i: (0, 0)),    # b1: resident
                pl.BlockSpec((1, H), lambda i: (0, 0)),    # w2: resident
                pl.BlockSpec(memory_space=pltpu.MemorySpace.SMEM),  # b2 scalar
            ],
            out_specs=pl.BlockSpec((1, 1, tb), lambda i: (i, 0, 0)),
        ),
        compiler_params=pltpu.CompilerParams(
            dimension_semantics=("parallel",),     # independent batch tiles (v7x: 2 TCs)
            vmem_limit_bytes=32 * 1024 * 1024,     # ample for (TB, D) double buffers
        ),
        cost_estimate=pl.CostEstimate(
            flops=2 * b_pad * D * H + 2 * b_pad * H,
            transcendentals=b_pad * H,
            bytes_accessed=(b_pad * D + b_pad + D * H + 3 * H + 1) * 4,
        ),
    )(x, w1, b1, w2, b2)

    # (num_tiles, 1, TB) -> (b_pad, 1) -> drop padded rows.
    return out.reshape(b_pad, 1)[:B]


def init_params(key, input_size, hidden=HIDDEN, out=1):
    """PyTorch Linear default init: U(-1/sqrt(fan_in), +1/sqrt(fan_in))."""
    k1, k2, k3, k4 = jax.random.split(key, 4)
    bound1 = 1.0 / (input_size ** 0.5)
    bound2 = 1.0 / (hidden ** 0.5)
    w1 = jax.random.uniform(k1, (input_size, hidden), jnp.float32, -bound1, bound1)
    b1 = jax.random.uniform(k2, (1, hidden), jnp.float32, -bound1, bound1)
    w2 = jax.random.uniform(k3, (out, hidden), jnp.float32, -bound2, bound2)
    b2 = jax.random.uniform(k4, (1, out), jnp.float32, -bound2, bound2)
    return w1, b1, w2, b2


if __name__ == "__main__":
    INPUT_SIZE = 32   # inputSize for Linear(inputSize, 16)
    BATCH = 8

    key = jax.random.PRNGKey(0)
    k_x, k_p, k_x2 = jax.random.split(key, 3)
    x = jax.random.normal(k_x, (BATCH, INPUT_SIZE), jnp.float32)
    w1, b1, w2, b2 = init_params(k_p, INPUT_SIZE)

    # Small demo batch (note: at this size runtime is pure launch overhead; the
    # kernel is built for large B where the tiled pipeline matters).
    y = jax.block_until_ready(premier_modele_forward(x, w1, b1, w2, b2))
    y_ref = jnp.tanh(x @ w1 + b1) @ w2.T + b2
    assert y.shape == (BATCH, 1)
    assert jnp.allclose(y, y_ref, atol=1e-4, rtol=1e-4)

    # Larger batch: exercises multiple grid tiles + tail padding.
    B2 = 3000
    x2 = jax.random.normal(k_x2, (B2, INPUT_SIZE), jnp.float32)
    y2 = jax.block_until_ready(premier_modele_forward(x2, w1, b1, w2, b2))
    y2_ref = jnp.tanh(x2 @ w1 + b1) @ w2.T + b2
    assert y2.shape == (B2, 1)
    assert jnp.allclose(y2, y2_ref, atol=1e-4, rtol=1e-4)

    print("KERNEL_OK")
</pallas_src>

<mosaic_0001>
module attributes {stable_mosaic.version = 11 : i64} {
  func.func @_mlp_kernel(%arg0: i32, %arg1: memref<256x32xf32, #tpu.memory_space<vmem>>, %arg2: memref<32x16xf32, #tpu.memory_space<vmem>>, %arg3: memref<1x16xf32, #tpu.memory_space<vmem>>, %arg4: memref<1x16xf32, #tpu.memory_space<vmem>>, %arg5: memref<1x1xf32, #tpu.memory_space<smem>>, %arg6: memref<1x1x256xf32, #tpu.memory_space<vmem>>) attributes {dimension_semantics = [#tpu.dimension_semantics<parallel>], iteration_bounds = array<i64: 1>, scalar_prefetch = 0 : i64, scratch_operands = 0 : i64, tpu.core_type = #tpu.core_type<tc>, window_params = [{transform_indices = @transform_0, window_bounds = array<i64: 256, 32>}, {pipeline_mode = #tpu.pipeline_mode<synchronous>, transform_indices = @transform_1, window_bounds = array<i64: 32, 16>}, {pipeline_mode = #tpu.pipeline_mode<synchronous>, transform_indices = @transform_2, window_bounds = array<i64: 1, 16>}, {pipeline_mode = #tpu.pipeline_mode<synchronous>, transform_indices = @transform_3, window_bounds = array<i64: 1, 16>}, {transform_indices = @transform_4, window_bounds = array<i64: 1, 1>}, {transform_indices = @transform_5, window_bounds = array<i64: 1, 1, 256>}]} {
    %c0 = arith.constant 0 : index
    %c0_0 = arith.constant 0 : index
    %0 = vector.load %arg1[%c0, %c0_0] : memref<256x32xf32, #tpu.memory_space<vmem>>, vector<256x32xf32>
    %c0_1 = arith.constant 0 : index
    %c0_2 = arith.constant 0 : index
    %1 = vector.load %arg2[%c0_1, %c0_2] : memref<32x16xf32, #tpu.memory_space<vmem>>, vector<32x16xf32>
    %cst = arith.constant dense<0.000000e+00> : vector<256x16xf32>
    %2 = tpu.matmul %0, %1, %cst {dimension_numbers = #tpu.dot_dimension_numbers<[1], [0], [0], [1], [0, 0, 1, 1], [], []>} : vector<256x32xf32>, vector<32x16xf32>, vector<256x16xf32> -> vector<256x16xf32>
    %c0_3 = arith.constant 0 : index
    %c0_4 = arith.constant 0 : index
    %3 = vector.load %arg3[%c0_3, %c0_4] : memref<1x16xf32, #tpu.memory_space<vmem>>, vector<1x16xf32>
    %4 = vector.broadcast %3 : vector<1x16xf32> to vector<256x16xf32>
    %5 = arith.addf %2, %4 : vector<256x16xf32>
    %6 = math.tanh %5 : vector<256x16xf32>
    %c0_5 = arith.constant 0 : index
    %c0_6 = arith.constant 0 : index
    %7 = vector.load %arg4[%c0_5, %c0_6] : memref<1x16xf32, #tpu.memory_space<vmem>>, vector<1x16xf32>
    "tpu.trace_start"() <{level = 10 : i32, message = "oh,bh->ob"}> : () -> ()
    %cst_7 = arith.constant dense<0.000000e+00> : vector<1x256xf32>
    %8 = tpu.matmul %7, %6, %cst_7 {dimension_numbers = #tpu.dot_dimension_numbers<[1], [1], [0], [0], [0, 0, 1, 0], [], []>} : vector<1x16xf32>, vector<256x16xf32>, vector<1x256xf32> -> vector<1x256xf32>
    "tpu.trace_stop"() : () -> ()
    %c0_8 = arith.constant 0 : index
    %c0_9 = arith.constant 0 : index
    %9 = memref.load %arg5[%c0_8, %c0_9] : memref<1x1xf32, #tpu.memory_space<smem>>
    %10 = vector.broadcast %9 : f32 to vector<1x256xf32>
    %11 = arith.addf %8, %10 : vector<1x256xf32>
    %12 = vector.shape_cast %11 : vector<1x256xf32> to vector<1x1x256xf32>
    %c0_10 = arith.constant 0 : index
    %c0_11 = arith.constant 0 : index
    %c0_12 = arith.constant 0 : index
    %13 = vector.load %arg6[%c0_10, %c0_11, %c0_12] : memref<1x1x256xf32, #tpu.memory_space<vmem>>, vector<1x1x256xf32>
    tpu.vector_store %arg6[%c0_10, %c0_11, %c0_12], %12 {strides = array<i32>} : memref<1x1x256xf32, #tpu.memory_space<vmem>>, vector<1x1x256xf32>,
    return
  }
  func.func @transform_0(%arg0: i32) -> (i32, i32) {
    %c0_i32 = arith.constant 0 : i32
    %c0_i32_0 = arith.constant 0 : i32
    return %arg0, %c0_i32 : i32, i32
  }
  func.func @transform_1(%arg0: i32) -> (i32, i32) {
    %c0_i32 = arith.constant 0 : i32
    %c0_i32_0 = arith.constant 0 : i32
    %c0_i32_1 = arith.constant 0 : i32
    return %c0_i32, %c0_i32_0 : i32, i32
  }
  func.func @transform_2(%arg0: i32) -> (i32, i32) {
    %c0_i32 = arith.constant 0 : i32
    %c0_i32_0 = arith.constant 0 : i32
    %c0_i32_1 = arith.constant 0 : i32
    return %c0_i32, %c0_i32_0 : i32, i32
  }
  func.func @transform_3(%arg0: i32) -> (i32, i32) {
    %c0_i32 = arith.constant 0 : i32
    %c0_i32_0 = arith.constant 0 : i32
    %c0_i32_1 = arith.constant 0 : i32
    return %c0_i32, %c0_i32_0 : i32, i32
  }
  func.func @transform_4(%arg0: i32) -> (i32, i32) {
    %c0_i32 = arith.constant 0 : i32
    %c0_i32_0 = arith.constant 0 : i32
    %c0_i32_1 = arith.constant 0 : i32
    return %c0_i32, %c0_i32_0 : i32, i32
  }
  func.func @transform_5(%arg0: i32) -> (i32, i32, i32) {
    %c0_i32 = arith.constant 0 : i32
    %c0_i32_0 = arith.constant 0 : i32
    %c0_i32_1 = arith.constant 0 : i32
    return %arg0, %c0_i32, %c0_i32_0 : i32, i32, i32
  }
}

</mosaic_0001>

<llo_original>
// kernel: tpu_custom_call.1
$region0: #{tpu_custom_call.1}
  #allocation0 [shape = 'u32[]', space=smem, size = 0x4, offset = 0x4, fixed_abs, tag = 'smem constant byte address 0x4 - core index']
  #allocation1 [shape = 'u32[72,128]{1,0:T(1,128)}', space=vmem, size = 0x9000, scoped, tag = 'internal scratch']
  #allocation2 [shape = 'f32[1,1]{1,0:T(1,128)S(6)}', space=smem, size = 0x200, scoped, tag = 'scoped memory for tpu_custom_call.1']
  %s0 = inlined_call_operand.vmem [shape: f32[256,32], index: 0, kind: input, shape index: {}]
  %s1 = inlined_call_operand.vmem [shape: f32[32,16], index: 1, kind: input, shape index: {}]
  %s2 = inlined_call_operand.vmem [shape: f32[1,16], index: 2, kind: input, shape index: {}]
  %s3 = inlined_call_operand.vmem [shape: f32[1,16], index: 3, kind: input, shape index: {}]
  %s4 = inlined_call_operand.<no memory space> [shape: f32[1,1], index: 4, kind: input, shape index: {}]
  %s5 = inlined_call_operand.hbm [shape: f32[1,1,256], index: 5, kind: output, shape index: {}]
  %s6 = sld [smem:[#allocation0]]
  $region30: #{tpu_custom_call.1} parent=0
    _
  %s8 = ssub.s32 1, %s6
  %s9 = scalar_select 0, %s8, %s6
  %10 = sst [smem:[#allocation2]] %s4
  $region1: #{tpu_custom_call.1} parent=0
    #allocation3 [shape = 'u8[1024]{0}', space=vmem, size = 0x400, scoped, tag = 'output window, operand 0, single buffered']
    #allocation4 [shape = 's32[1]{0}', space=sflag, size = 0x4, scoped, tag = 'scoped memory for tpu_custom_call.1']
    %11 = vsyncpa [#allocation4], 0
    // Predicated region
    $region2: #{tpu_custom_call.1} parent=1 // pred_check
      _
    $region3: #{tpu_custom_call.1} parent=1 // pred_check_branch
      %13 = sbr.rel (0) target = $region5
    $region4: #{tpu_custom_call.1} parent=1 // pred_region
      _
    $region5: #{tpu_custom_call.1} parent=1 // pred_fallthru
      _
    // Predicated region
    $region6: #{tpu_custom_call.1} parent=1 // pred_check
      _
    $region7: #{tpu_custom_call.1} parent=1 // pred_check_branch
      %15 = sbr.rel (0) target = $region9
    $region8: #{tpu_custom_call.1} parent=1 // pred_region
      _
    $region9: #{tpu_custom_call.1} parent=1 // pred_fallthru
      _
    // Predicated region
    $region10: #{tpu_custom_call.1} parent=1 // pred_check
      _
    $region11: #{tpu_custom_call.1} parent=1 // pred_check_branch
      %17 = sbr.rel (0) target = $region13
    $region12: #{tpu_custom_call.1} parent=1 // pred_region
      _
    $region13: #{tpu_custom_call.1} parent=1 // pred_fallthru
      _
    // Predicated region
    $region14: #{tpu_custom_call.1} parent=1 // pred_check
      _
    $region15: #{tpu_custom_call.1} parent=1 // pred_check_branch
      %19 = sbr.rel (0) target = $region17
    $region16: #{tpu_custom_call.1} parent=1 // pred_region
      _
    $region17: #{tpu_custom_call.1} parent=1 // pred_fallthru
      _
    // Predicated region
    $region18: #{tpu_custom_call.1} parent=1 // pred_check
      _
    $region19: #{tpu_custom_call.1} parent=1 // pred_check_branch
      %21 = sbr.rel (0) target = $region21
    $region20: #{tpu_custom_call.1} parent=1 // pred_region
      _
    $region21: #{tpu_custom_call.1} parent=1 // pred_fallthru
      _
    %v22 = vld [vmem:[%s0] sm:$0xff]
    %v23 = vld [vmem:[%s0 + $0x8] sm:$0xff]
    %v24 = vld [vmem:[%s0 + $0x10] sm:$0xff]
    %v25 = vld [vmem:[%s0 + $0x18] sm:$0xff]
    %v26 = vld [vmem:[%s0 + $0x20] sm:$0xff]
    %v27 = vld [vmem:[%s0 + $0x28] sm:$0xff]
    %v28 = vld [vmem:[%s0 + $0x30] sm:$0xff]
    %v29 = vld [vmem:[%s0 + $0x38] sm:$0xff]
    %v30 = vld [vmem:[%s0 + $0x40] sm:$0xff]
    %v31 = vld [vmem:[%s0 + $0x48] sm:$0xff]
    %v32 = vld [vmem:[%s0 + $0x50] sm:$0xff]
    %v33 = vld [vmem:[%s0 + $0x58] sm:$0xff]
    %v34 = vld [vmem:[%s0 + $0x60] sm:$0xff]
    %v35 = vld [vmem:[%s0 + $0x68] sm:$0xff]
    %v36 = vld [vmem:[%s0 + $0x70] sm:$0xff]
    %v37 = vld [vmem:[%s0 + $0x78] sm:$0xff]
    %v38 = vld [vmem:[%s0 + $0x80] sm:$0xff]
    %v39 = vld [vmem:[%s0 + $0x88] sm:$0xff]
    %v40 = vld [vmem:[%s0 + $0x90] sm:$0xff]
    %v41 = vld [vmem:[%s0 + $0x98] sm:$0xff]
    %v42 = vld [vmem:[%s0 + $0xa0] sm:$0xff]
    %v43 = vld [vmem:[%s0 + $0xa8] sm:$0xff]
    %v44 = vld [vmem:[%s0 + $0xb0] sm:$0xff]
    %v45 = vld [vmem:[%s0 + $0xb8] sm:$0xff]
    %v46 = vld [vmem:[%s0 + $0xc0] sm:$0xff]
    %v47 = vld [vmem:[%s0 + $0xc8] sm:$0xff]
    %v48 = vld [vmem:[%s0 + $0xd0] sm:$0xff]
    %v49 = vld [vmem:[%s0 + $0xd8] sm:$0xff]
    %v50 = vld [vmem:[%s0 + $0xe0] sm:$0xff]
    %v51 = vld [vmem:[%s0 + $0xe8] sm:$0xff]
    %v52 = vld [vmem:[%s0 + $0xf0] sm:$0xff]
    %v53 = vld [vmem:[%s0 + $0xf8] sm:$0xff]
    %v54 = vld [vmem:[%s1] sm:$0xff]
    %v55 = vld [vmem:[%s1 + $0x8] sm:$0xff]
    %v56 = vld [vmem:[%s1 + $0x10] sm:$0xff]
    %v57 = vld [vmem:[%s1 + $0x18] sm:$0xff]
    %v58 = vld [vmem:[%s2] sm:$0x1]
    %v60 = vperm.slane %v58, 0
    %vm62 = vcmask 261120
    %v64 = vsel %vm62, %v22, 0
    %v67 = vsel %vm62, %v23, 0
    %v70 = vsel %vm62, %v24, 0
    %v73 = vsel %vm62, %v25, 0
    %v76 = vsel %vm62, %v26, 0
    %v79 = vsel %vm62, %v27, 0
    %v82 = vsel %vm62, %v28, 0
    %v85 = vsel %vm62, %v29, 0
    %v88 = vsel %vm62, %v30, 0
    %v91 = vsel %vm62, %v31, 0
    %v94 = vsel %vm62, %v32, 0
    %v97 = vsel %vm62, %v33, 0
    %v100 = vsel %vm62, %v34, 0
    %v103 = vsel %vm62, %v35, 0
    %v106 = vsel %vm62, %v36, 0
    %v109 = vsel %vm62, %v37, 0
    %v112 = vsel %vm62, %v38, 0
    %v115 = vsel %vm62, %v39, 0
    %v118 = vsel %vm62, %v40, 0
    %v121 = vsel %vm62, %v41, 0
    %v124 = vsel %vm62, %v42, 0
    %v127 = vsel %vm62, %v43, 0
    %v130 = vsel %vm62, %v44, 0
    %v133 = vsel %vm62, %v45, 0
    %v136 = vsel %vm62, %v46, 0
    %v139 = vsel %vm62, %v47, 0
    %v142 = vsel %vm62, %v48, 0
    %v145 = vsel %vm62, %v49, 0
    %v148 = vsel %vm62, %v50, 0
    %v151 = vsel %vm62, %v51, 0
    %v154 = vsel %vm62, %v52, 0
    %v157 = vsel %vm62, %v53, 0
    %159 = vmatpush.msra.mxu0 0.0
    %160 = vmatpush.msra.mxu0 0.0
    %161 = vmatpush.msra.mxu0 0.0
    %162 = vmatpush.msra.mxu0 0.0
    %163 = vmatpush.msra.mxu0 0.0
    %164 = vmatpush.msra.mxu0 0.0
    %165 = vmatpush.msra.mxu0 0.0
    %166 = vmatpush.msra.mxu0 0.0
    %167 = vmatpush.msra.mxu0 0.0
    %168 = vmatpush.msra.mxu0 0.0
    %169 = vmatpush.msra.mxu0 0.0
    %170 = vmatpush.msra.mxu0 0.0
    %171 = vmatpush.msra.mxu0 %v57
    %172 = vmatpush.msra.mxu0 %v56
    %173 = vmatpush.msra.mxu0 %v55
    %174 = vmatpush.msra.mxu0 %v54
    %175 = vmatmul.f32.gmra.mxu0 %v64
    %v176 = vpop.f32.mrf.mxu0
    %v177 = vadd.f32 %v60, %v176
    %178 = vmatmul.f32.gmra.mxu0 %v67
    %v179 = vpop.f32.mrf.mxu0
    %v180 = vadd.f32 %v60, %v179
    %181 = vmatmul.f32.gmra.mxu0 %v70
    %v182 = vpop.f32.mrf.mxu0
    %v183 = vadd.f32 %v60, %v182
    %184 = vmatmul.f32.gmra.mxu0 %v73
    %v185 = vpop.f32.mrf.mxu0
    %v186 = vadd.f32 %v60, %v185
    %187 = vmatmul.f32.gmra.mxu0 %v76
    %v188 = vpop.f32.mrf.mxu0
    %v189 = vadd.f32 %v60, %v188
    %190 = vmatmul.f32.gmra.mxu0 %v79
    %v191 = vpop.f32.mrf.mxu0
    %v192 = vadd.f32 %v60, %v191
    %193 = vmatmul.f32.gmra.mxu0 %v82
    %v194 = vpop.f32.mrf.mxu0
    %v195 = vadd.f32 %v60, %v194
    %196 = vmatmul.f32.gmra.mxu0 %v85
    %v197 = vpop.f32.mrf.mxu0
    %v198 = vadd.f32 %v60, %v197
    %199 = vmatmul.f32.gmra.mxu0 %v88
    %v200 = vpop.f32.mrf.mxu0
    %v201 = vadd.f32 %v60, %v200
    %202 = vmatmul.f32.gmra.mxu0 %v91
    %v203 = vpop.f32.mrf.mxu0
    %v204 = vadd.f32 %v60, %v203
    %205 = vmatmul.f32.gmra.mxu0 %v94
    %v206 = vpop.f32.mrf.mxu0
    %v207 = vadd.f32 %v60, %v206
    %208 = vmatmul.f32.gmra.mxu0 %v97
    %v209 = vpop.f32.mrf.mxu0
    %v210 = vadd.f32 %v60, %v209
    %211 = vmatmul.f32.gmra.mxu0 %v100
    %v212 = vpop.f32.mrf.mxu0
    %v213 = vadd.f32 %v60, %v212
    %214 = vmatmul.f32.gmra.mxu0 %v103
    %v215 = vpop.f32.mrf.mxu0
    %v216 = vadd.f32 %v60, %v215
    %217 = vmatmul.f32.gmra.mxu0 %v106
    %v218 = vpop.f32.mrf.mxu0
    %v219 = vadd.f32 %v60, %v218
    %220 = vmatmul.f32.gmra.mxu0 %v109
    %v221 = vpop.f32.mrf.mxu0
    %v222 = vadd.f32 %v60, %v221
    %223 = vmatmul.f32.gmra.mxu0 %v112
    %v224 = vpop.f32.mrf.mxu0
    %v225 = vadd.f32 %v60, %v224
    %226 = vmatmul.f32.gmra.mxu0 %v115
    %v227 = vpop.f32.mrf.mxu0
    %v228 = vadd.f32 %v60, %v227
    %229 = vmatmul.f32.gmra.mxu0 %v118
    %v230 = vpop.f32.mrf.mxu0
    %v231 = vadd.f32 %v60, %v230
    %232 = vmatmul.f32.gmra.mxu0 %v121
    %v233 = vpop.f32.mrf.mxu0
    %v234 = vadd.f32 %v60, %v233
    %235 = vmatmul.f32.gmra.mxu0 %v124
    %v236 = vpop.f32.mrf.mxu0
    %v237 = vadd.f32 %v60, %v236
    %238 = vmatmul.f32.gmra.mxu0 %v127
    %v239 = vpop.f32.mrf.mxu0
    %v240 = vadd.f32 %v60, %v239
    %241 = vmatmul.f32.gmra.mxu0 %v130
    %v242 = vpop.f32.mrf.mxu0
    %v243 = vadd.f32 %v60, %v242
    %244 = vmatmul.f32.gmra.mxu0 %v133
    %v245 = vpop.f32.mrf.mxu0
    %v246 = vadd.f32 %v60, %v245
    %247 = vmatmul.f32.gmra.mxu0 %v136
    %v248 = vpop.f32.mrf.mxu0
    %v249 = vadd.f32 %v60, %v248
    %250 = vmatmul.f32.gmra.mxu0 %v139
    %v251 = vpop.f32.mrf.mxu0
    %v252 = vadd.f32 %v60, %v251
    %253 = vmatmul.f32.gmra.mxu0 %v142
    %v254 = vpop.f32.mrf.mxu0
    %v255 = vadd.f32 %v60, %v254
    %256 = vmatmul.f32.gmra.mxu0 %v145
    %v257 = vpop.f32.mrf.mxu0
    %v258 = vadd.f32 %v60, %v257
    %259 = vmatmul.f32.gmra.mxu0 %v148
    %v260 = vpop.f32.mrf.mxu0
    %v261 = vadd.f32 %v60, %v260
    %262 = vmatmul.f32.gmra.mxu0 %v151
    %v263 = vpop.f32.mrf.mxu0
    %v264 = vadd.f32 %v60, %v263
    %265 = vmatmul.f32.gmra.mxu0 %v154
    %v266 = vpop.f32.mrf.mxu0
    %v267 = vadd.f32 %v60, %v266
    %268 = vmatmul.f32.gmra.mxu0 %v157
    %v269 = vpop.f32.mrf.mxu0
    %v270 = vadd.f32 %v60, %v269
    %271 = vdwg.mxu0
    %v272 = vtanh.pop %v177
    %v273 = vtanh.pop %v180
    %v274 = vtanh.pop %v183
    %v275 = vtanh.pop %v186
    %v276 = vtanh.pop %v189
    %v277 = vtanh.pop %v192
    %v278 = vtanh.pop %v195
    %v279 = vtanh.pop %v198
    %v280 = vtanh.pop %v201
    %v281 = vtanh.pop %v204
    %v282 = vtanh.pop %v207
    %v283 = vtanh.pop %v210
    %v284 = vtanh.pop %v213
    %v285 = vtanh.pop %v216
    %v286 = vtanh.pop %v219
    %v287 = vtanh.pop %v222
    %v288 = vtanh.pop %v225
    %v289 = vtanh.pop %v228
    %v290 = vtanh.pop %v231
    %v291 = vtanh.pop %v234
    %v292 = vtanh.pop %v237
    %v293 = vtanh.pop %v240
    %v294 = vtanh.pop %v243
    %v295 = vtanh.pop %v246
    %v296 = vtanh.pop %v249
    %v297 = vtanh.pop %v252
    %v298 = vtanh.pop %v255
    %v299 = vtanh.pop %v258
    %v300 = vtanh.pop %v261
    %v301 = vtanh.pop %v264
    %v302 = vtanh.pop %v267
    %v303 = vtanh.pop %v270
    %v304 = vld [vmem:[%s3] sm:$0x1]
    %s305 = sld [smem:[#allocation2]]
    %v306 = vstv %s305
    %vm307 = vcmask 130048
    %v309 = vsel %vm307, %v304, 0
    %v312 = vsel %vm307, %v272, 0
    %v315 = vsel %vm307, %v273, 0
    %v318 = vsel %vm307, %v274, 0
    %v321 = vsel %vm307, %v275, 0
    %v324 = vsel %vm307, %v276, 0
    %v327 = vsel %vm307, %v277, 0
    %v330 = vsel %vm307, %v278, 0
    %v333 = vsel %vm307, %v279, 0
    %v336 = vsel %vm307, %v280, 0
    %v339 = vsel %vm307, %v281, 0
    %v342 = vsel %vm307, %v282, 0
    %v345 = vsel %vm307, %v283, 0
    %v348 = vsel %vm307, %v284, 0
    %v351 = vsel %vm307, %v285, 0
    %v354 = vsel %vm307, %v286, 0
    %v357 = vsel %vm307, %v287, 0
    %v360 = vsel %vm307, %v288, 0
    %v363 = vsel %vm307, %v289, 0
    %v366 = vsel %vm307, %v290, 0
    %v369 = vsel %vm307, %v291, 0
    %v372 = vsel %vm307, %v292, 0
    %v375 = vsel %vm307, %v293, 0
    %v378 = vsel %vm307, %v294, 0
    %v381 = vsel %vm307, %v295, 0
    %v384 = vsel %vm307, %v296, 0
    %v387 = vsel %vm307, %v297, 0
    %v390 = vsel %vm307, %v298, 0
    %v393 = vsel %vm307, %v299, 0
    %v396 = vsel %vm307, %v300, 0
    %v399 = vsel %vm307, %v301, 0
    %v402 = vsel %vm307, %v302, 0
    %v405 = vsel %vm307, %v303, 0
    %407 = vmatpush.xpose.msra.mxu0 %v357
    %408 = vmatpush.xpose.msra.mxu0 %v354
    %409 = vmatpush.xpose.msra.mxu0 %v351
    %410 = vmatpush.xpose.msra.mxu0 %v348
    %411 = vmatpush.xpose.msra.mxu0 %v345
    %412 = vmatpush.xpose.msra.mxu0 %v342
    %413 = vmatpush.xpose.msra.mxu0 %v339
    %414 = vmatpush.xpose.msra.mxu0 %v336
    %415 = vmatpush.xpose.msra.mxu0 %v333
    %416 = vmatpush.xpose.msra.mxu0 %v330
    %417 = vmatpush.xpose.msra.mxu0 %v327
    %418 = vmatpush.xpose.msra.mxu0 %v324
    %419 = vmatpush.xpose.msra.mxu0 %v321
    %420 = vmatpush.xpose.msra.mxu0 %v318
    %421 = vmatpush.xpose.msra.mxu0 %v315
    %422 = vmatpush.xpose.msra.mxu0 %v312
    %423 = vmatmul.f32.gmra.mxu0 %v309
    %v424 = vpop.f32.mrf.mxu0
    %v425 = vadd.f32 %v306, %v424
    %426 = vdwg.mxu0
    %427 = vmatpush.xpose.msra.mxu0 %v405
    %428 = vmatpush.xpose.msra.mxu0 %v402
    %429 = vmatpush.xpose.msra.mxu0 %v399
    %430 = vmatpush.xpose.msra.mxu0 %v396
    %431 = vmatpush.xpose.msra.mxu0 %v393
    %432 = vmatpush.xpose.msra.mxu0 %v390
    %433 = vmatpush.xpose.msra.mxu0 %v387
    %434 = vmatpush.xpose.msra.mxu0 %v384
    %435 = vmatpush.xpose.msra.mxu0 %v381
    %436 = vmatpush.xpose.msra.mxu0 %v378
    %437 = vmatpush.xpose.msra.mxu0 %v375
    %438 = vmatpush.xpose.msra.mxu0 %v372
    %439 = vmatpush.xpose.msra.mxu0 %v369
    %440 = vmatpush.xpose.msra.mxu0 %v366
    %441 = vmatpush.xpose.msra.mxu0 %v363
    %442 = vmatpush.xpose.msra.mxu0 %v360
    %443 = vmatmul.f32.gmra.mxu0 %v309
    %v444 = vpop.f32.mrf.mxu0
    %v445 = vadd.f32 %v306, %v444
    %446 = vdwg.mxu0
    %v449 = vrot.slane %v445, 7
    %vm450 = vcmask 1040384
    %v451 = vsel %vm450, %v425, %v449
    %v453 = vlaneseq
    %vm454 = vcmp.ge.s32.totalorder %v453, 0
    %vm455 = vcmp.lt.s32.totalorder %v453, 256
    %vm456 = vmand %vm454, %vm455
    %457 = vst.msk [vmem:[#allocation3] sm:$0x3] %vm456, %v451
    // Predicated region
    $region22: #{tpu_custom_call.1} parent=1 // pred_check
      _
    $region23: #{tpu_custom_call.1} parent=1 // pred_check_branch
      %459 = sbr.rel (0) target = $region25
    $region24: #{tpu_custom_call.1} parent=1 // pred_region
      %461 = vsyncadd [#allocation4], 0
      %s463 = sshll.u32 [#allocation3], 4
      %s464 = int_to_ptr.vmem [resolvable:$true] %s463
      %s465 = sshll.u32 %s5, 4
      %s466 = int_to_ptr.hbm [resolvable:$true] %s465
      %468 = dma.vmem_to_hbm [thread:$0]  %s464, 32, %s466, [#allocation4]
    $region25: #{tpu_custom_call.1} parent=1 // pred_fallthru
      _
    // Predicated region
    $region26: #{tpu_custom_call.1} parent=1 // pred_check
      _
    $region27: #{tpu_custom_call.1} parent=1 // pred_check_branch
      %470 = sbr.rel (0) target = $region29
    $region28: #{tpu_custom_call.1} parent=1 // pred_region
      %472 = dma.done [#allocation4], 32
    $region29: #{tpu_custom_call.1} parent=1 // pred_fallthru
      _
    %473 = vsyncpa [#allocation4], 1

</llo_original>
